<compile_context>
chip_gen: v5e
topology: v5e:2x2
jax: 0.10.0
libtpu: 0.0.40
codegen_flags: <defaults>
</compile_context>

<pallas_src>
import functools

import jax
import jax.numpy as jnp
from jax import lax
from jax.experimental import pallas as pl
from jax.experimental.pallas import tpu as pltpu


def _round_up(x, m):
    return (x + m - 1) // m * m


def _default_max_tile_h():
    """Pick the hidden-tile width from the chip's VMEM capacity."""
    try:
        vmem_bytes = pltpu.get_tpu_info().vmem_capacity_bytes
    except Exception:
        vmem_bytes = 64 << 20  # conservative (v7x-sized) fallback
    # ~131072 on 128-MiB chips (v5e / v6e), ~65536 on 64-MiB v7x.
    return 131072 if vmem_bytes >= (100 << 20) else 65536


def mlp_kernel(x_ref, w1_ref, w2t_ref, o_ref):
    k = pl.program_id(1)

    @pl.when(k == 0)
    def _():
        o_ref[...] = jnp.zeros_like(o_ref)

    # fc1 (+ fused bias via the augmented ones column of x): bf16 x bf16 on the
    # MXU with f32 accumulation.
    h = jnp.dot(x_ref[...], w1_ref[...], preferred_element_type=jnp.float32)
    # ReLU, then drop to bf16 so fc2 is also a native bf16 MXU matmul and the
    # (B, tile_h) slab only makes a half-width trip through VMEM.
    h = jnp.maximum(h, 0.0).astype(jnp.bfloat16)

    # fc2 partial: contract the hidden tile of h (B, TH) with the lane-dense
    # (Out, TH) transposed weight tile -> (B, Out), accumulated in f32 directly
    # in the resident output block (its index map is constant across k).
    o_ref[0, :, :] += lax.dot_general(
        h,
        w2t_ref[...],
        dimension_numbers=(((1,), (1,)), ((), ())),
        preferred_element_type=jnp.float32,
    )


def pack_simple_mlp_params(w1, b1, w2, *, max_tile_h=None, num_core_splits=1):
    """One-time weight packing (hoisted out of the forward hot path).

    w1: (In, H)   (== PyTorch fc1.weight.T)
    b1: (H,)
    w2: (H, Out)  (== PyTorch fc2.weight.T)

    Returns a dict with bf16, lane-dense (hidden-last), zero-padded weights plus
    the tiling parameters the forward needs.
    """
    In, H = w1.shape
    Out = w2.shape[1]
    if max_tile_h is None:
        max_tile_h = _default_max_tile_h()

    tile_h = min(max_tile_h, _round_up(pl.cdiv(H, num_core_splits), 128))
    H_pad = _round_up(H, num_core_splits * tile_h)
    pad = H_pad - H

    # Fold b1 into W1 via an augmented ones column on x (no separate padded
    # (1, H) bias stream, no bias add in the kernel).
    w1_aug = jnp.concatenate([w1, b1.reshape(1, H)], axis=0)              # (In+1, H)
    w1_aug = jnp.pad(w1_aug, ((0, 0), (0, pad))).astype(jnp.bfloat16)     # (In+1, H_pad)
    w2t = jnp.pad(w2.T, ((0, 0), (0, pad))).astype(jnp.bfloat16)          # (Out,  H_pad)

    return dict(
        w1_aug=w1_aug,
        w2t=w2t,
        tile_h=tile_h,
        num_core_splits=num_core_splits,
    )


def simple_mlp_forward_packed(x, w1_aug, w2t, b2, *, tile_h, num_core_splits=1):
    """Fused fc1 -> ReLU -> fc2 forward on pre-packed weights.

    x:      (B, In)        f32
    w1_aug: (In+1, H_pad)  bf16  (b1 folded into the last row)
    w2t:    (Out, H_pad)   bf16  (fc2.weight, lane-dense over H)
    b2:     (Out,)         f32
    """
    B, In = x.shape
    In1, H_pad = w1_aug.shape
    Out = w2t.shape[0]
    assert In1 == In + 1 and w2t.shape[1] == H_pad
    assert H_pad % (num_core_splits * tile_h) == 0
    num_k = H_pad // (num_core_splits * tile_h)

    # Augment x with a ones column (fc1 bias) and stream activations in bf16.
    x_aug = jnp.concatenate(
        [x, jnp.ones((B, 1), x.dtype)], axis=1).astype(jnp.bfloat16)      # (B, In+1)

    # Per-step VMEM footprint: double-buffered bf16 weight tiles + the f32 h
    # slab and its bf16 copy, plus headroom for layout padding / internal
    # scratch.  Stays under 64 MiB with tile_h<=65536 (v7x) and well under
    # 128 MiB with tile_h<=131072 (v5e / v6e).
    vmem_budget = (
        2 * 2 * (In1 + Out) * tile_h * 2      # double-buffered bf16 weight tiles
        + B * tile_h * (4 + 2)                # f32 h + bf16 copy
        + (16 << 20)                          # headroom
    )
    vmem_limit = int(min(max(vmem_budget, 32 << 20), 100 << 20))

    flops = 2 * B * H_pad * (In1 + Out)
    bytes_accessed = (
        (In1 + Out) * H_pad * 2               # streamed bf16 weights
        + x_aug.size * 2                      # activations
        + num_core_splits * B * Out * 4       # partial outputs
    )

    # On v7x (2 TensorCores) mark the split axis CORE_PARALLEL so the two
    # halves of the hidden reduction really land on different cores; on 1-TC
    # chips the size-1 axis is just a degenerate loop.
    sem0 = pltpu.CORE_PARALLEL if num_core_splits > 1 else pltpu.ARBITRARY

    partial = pl.pallas_call(
        mlp_kernel,
        out_shape=jax.ShapeDtypeStruct((num_core_splits, B, Out), jnp.float32),
        grid_spec=pltpu.PrefetchScalarGridSpec(
            num_scalar_prefetch=0,
            grid=(num_core_splits, num_k),
            in_specs=[
                # x: tiny, resident full block.
                pl.BlockSpec((B, In1), lambda s, k: (0, 0)),
                # W1 (augmented) hidden tile.
                pl.BlockSpec((In1, tile_h), lambda s, k: (0, s * num_k + k)),
                # W2^T hidden tile (lane-dense: Out on sublanes, H on lanes).
                pl.BlockSpec((Out, tile_h), lambda s, k: (0, s * num_k + k)),
            ],
            out_specs=pl.BlockSpec((1, B, Out), lambda s, k: (s, 0, 0)),
        ),
        compiler_params=pltpu.CompilerParams(
            dimension_semantics=(sem0, pltpu.ARBITRARY),
            vmem_limit_bytes=vmem_limit,
        ),
        cost_estimate=pl.CostEstimate(
            flops=flops, transcendentals=0, bytes_accessed=bytes_accessed),
    )(x_aug, w1_aug, w2t)

    # Sum per-core partials and add the fc2 bias in f32.
    return partial.sum(axis=0) + b2.reshape(1, Out)


if __name__ == "__main__":
    # Small, deterministic shapes consistent with the module's forward.
    # (Original uses hidden_size=1_000_000; scaled down for a synthetic run.
    #  2000 is intentionally NOT a multiple of 128 to exercise the padding path.)
    batch_size = 32
    input_size = 10
    hidden_size = 2000
    output_size = 5

    key = jax.random.PRNGKey(0)
    kx, kw1, kb1, kw2, kb2 = jax.random.split(key, 5)

    x = jax.random.normal(kx, (batch_size, input_size), dtype=jnp.float32)
    # Weights stored (in, out); equivalent to PyTorch Linear weight.T
    w1 = jax.random.normal(kw1, (input_size, hidden_size), dtype=jnp.float32) * 0.05
    b1 = jax.random.normal(kb1, (hidden_size,), dtype=jnp.float32) * 0.05
    w2 = jax.random.normal(kw2, (hidden_size, output_size), dtype=jnp.float32) * 0.05
    b2 = jax.random.normal(kb2, (output_size,), dtype=jnp.float32) * 0.05

    # One-time weight packing (hoisted out of the per-call hot path).
    # Set num_core_splits=2 when targeting v7x (2 TensorCores / chip).
    packed = pack_simple_mlp_params(w1, b1, w2, num_core_splits=1)

    fwd = jax.jit(functools.partial(
        simple_mlp_forward_packed,
        tile_h=packed["tile_h"],
        num_core_splits=packed["num_core_splits"],
    ))

    out = fwd(x, packed["w1_aug"], packed["w2t"], b2)
    out = jax.block_until_ready(out)

    # Pure-JAX f32 reference (kernel streams weights/activations in bf16 ->
    # loose tolerance).
    ref = jnp.maximum(x @ w1 + b1, 0.0) @ w2 + b2
    assert out.shape == (batch_size, output_size)
    assert jnp.allclose(out, ref, atol=2e-2, rtol=2e-2), "mismatch vs reference"

    print("KERNEL_OK")
</pallas_src>

<mosaic_0001>
module attributes {stable_mosaic.version = 11 : i64} {
  func.func @mlp_kernel(%arg0: i32, %arg1: i32, %arg2: memref<32x11xbf16, #tpu.memory_space<vmem>>, %arg3: memref<11x2048xbf16, #tpu.memory_space<vmem>>, %arg4: memref<5x2048xbf16, #tpu.memory_space<vmem>>, %arg5: memref<1x32x5xf32, #tpu.memory_space<vmem>>) attributes {dimension_semantics = [#tpu.dimension_semantics<arbitrary>, #tpu.dimension_semantics<arbitrary>], iteration_bounds = array<i64: 1, 1>, scalar_prefetch = 0 : i64, scratch_operands = 0 : i64, tpu.core_type = #tpu.core_type<tc>, window_params = [{pipeline_mode = #tpu.pipeline_mode<synchronous>, transform_indices = @transform_0, window_bounds = array<i64: 32, 11>}, {transform_indices = @transform_1, window_bounds = array<i64: 11, 2048>}, {transform_indices = @transform_2, window_bounds = array<i64: 5, 2048>}, {transform_indices = @transform_3, window_bounds = array<i64: 1, 32, 5>}]} {
    %c0_i32 = arith.constant 0 : i32
    %0 = arith.cmpi eq, %arg1, %c0_i32 : i32
    %1 = arith.extui %0 : i1 to i32
    %c0_i32_0 = arith.constant 0 : i32
    %2 = arith.cmpi ne, %1, %c0_i32_0 : i32
    scf.if %2 {
      %cst_14 = arith.constant 0.000000e+00 : f32
      %17 = vector.broadcast %cst_14 : f32 to vector<1x32x5xf32>
      %c0_15 = arith.constant 0 : index
      %c0_16 = arith.constant 0 : index
      %c0_17 = arith.constant 0 : index
      %18 = vector.load %arg5[%c0_15, %c0_16, %c0_17] : memref<1x32x5xf32, #tpu.memory_space<vmem>>, vector<1x32x5xf32>
      tpu.vector_store %arg5[%c0_15, %c0_16, %c0_17], %17 {strides = array<i32>} : memref<1x32x5xf32, #tpu.memory_space<vmem>>, vector<1x32x5xf32>,
    } else {
    }
    %c0 = arith.constant 0 : index
    %c0_1 = arith.constant 0 : index
    %3 = vector.load %arg2[%c0, %c0_1] : memref<32x11xbf16, #tpu.memory_space<vmem>>, vector<32x11xbf16>
    %c0_2 = arith.constant 0 : index
    %c0_3 = arith.constant 0 : index
    %4 = vector.load %arg3[%c0_2, %c0_3] : memref<11x2048xbf16, #tpu.memory_space<vmem>>, vector<11x2048xbf16>
    %cst = arith.constant dense<0.000000e+00> : vector<32x2048xf32>
    %5 = tpu.matmul %3, %4, %cst {dimension_numbers = #tpu.dot_dimension_numbers<[1], [0], [0], [1], [0, 0, 1, 1], [], []>} : vector<32x11xbf16>, vector<11x2048xbf16>, vector<32x2048xf32> -> vector<32x2048xf32>
    %cst_4 = arith.constant 0.000000e+00 : f32
    %6 = vector.broadcast %cst_4 : f32 to vector<32x2048xf32>
    %7 = arith.maximumf %5, %6 : vector<32x2048xf32>
    %8 = arith.truncf %7 : vector<32x2048xf32> to vector<32x2048xbf16>
    %c0_5 = arith.constant 0 : index
    %c0_6 = arith.constant 0 : index
    %c0_7 = arith.constant 0 : index
    %9 = vector.load %arg5[%c0_5, %c0_6, %c0_7] : memref<1x32x5xf32, #tpu.memory_space<vmem>>, vector<1x32x5xf32>
    %10 = vector.shape_cast %9 : vector<1x32x5xf32> to vector<32x5xf32>
    %c0_8 = arith.constant 0 : index
    %c0_9 = arith.constant 0 : index
    %11 = vector.load %arg4[%c0_8, %c0_9] : memref<5x2048xbf16, #tpu.memory_space<vmem>>, vector<5x2048xbf16>
    %cst_10 = arith.constant dense<0.000000e+00> : vector<32x5xf32>
    %12 = tpu.matmul %8, %11, %cst_10 {dimension_numbers = #tpu.dot_dimension_numbers<[1], [1], [0], [0], [0, 0, 1, 0], [], []>} : vector<32x2048xbf16>, vector<5x2048xbf16>, vector<32x5xf32> -> vector<32x5xf32>
    %13 = arith.addf %10, %12 : vector<32x5xf32>
    %c0_11 = arith.constant 0 : index
    %c0_12 = arith.constant 0 : index
    %c0_13 = arith.constant 0 : index
    %14 = vector.load %arg5[%c0_11, %c0_12, %c0_13] : memref<1x32x5xf32, #tpu.memory_space<vmem>>, vector<1x32x5xf32>
    %15 = vector.shape_cast %14 : vector<1x32x5xf32> to vector<32x5xf32>
    %16 = vector.shape_cast %13 : vector<32x5xf32> to vector<1x32x5xf32>
    tpu.vector_store %arg5[%c0_11, %c0_12, %c0_13], %16 {strides = array<i32>} : memref<1x32x5xf32, #tpu.memory_space<vmem>>, vector<1x32x5xf32>,
    return
  }
  func.func @transform_0(%arg0: i32, %arg1: i32) -> (i32, i32) {
    %c0_i32 = arith.constant 0 : i32
    %c0_i32_0 = arith.constant 0 : i32
    %c0_i32_1 = arith.constant 0 : i32
    return %c0_i32, %c0_i32_0 : i32, i32
  }
  func.func @transform_1(%arg0: i32, %arg1: i32) -> (i32, i32) {
    %c1_i32 = arith.constant 1 : i32
    %0 = arith.muli %arg0, %c1_i32 : i32
    %1 = arith.addi %0, %arg1 : i32
    %c0_i32 = arith.constant 0 : i32
    %c0_i32_0 = arith.constant 0 : i32
    return %c0_i32, %1 : i32, i32
  }
  func.func @transform_2(%arg0: i32, %arg1: i32) -> (i32, i32) {
    %c1_i32 = arith.constant 1 : i32
    %0 = arith.muli %arg0, %c1_i32 : i32
    %1 = arith.addi %0, %arg1 : i32
    %c0_i32 = arith.constant 0 : i32
    %c0_i32_0 = arith.constant 0 : i32
    return %c0_i32, %1 : i32, i32
  }
  func.func @transform_3(%arg0: i32, %arg1: i32) -> (i32, i32, i32) {
    %c0_i32 = arith.constant 0 : i32
    %c0_i32_0 = arith.constant 0 : i32
    %c0_i32_1 = arith.constant 0 : i32
    return %arg0, %c0_i32, %c0_i32_0 : i32, i32, i32
  }
}

</mosaic_0001>

<llo_original>
// kernel: simple_mlp_forward_packed.1
$region0: #{simple_mlp_forward_packed.1}
  #allocation0 [shape = 'u32[]', space=smem, size = 0x4, offset = 0x4, fixed_abs, tag = 'smem constant byte address 0x4 - core index']
  #allocation1 [shape = 'u32[72,128]{1,0:T(1,128)}', space=vmem, size = 0x9000, scoped, tag = 'internal scratch']
  %s0 = inlined_call_operand.vmem [shape: bf16[32,11], index: 0, kind: input, shape index: {}]
  %s1 = inlined_call_operand.hbm [shape: bf16[11,2048], index: 1, kind: input, shape index: {}]
  %s2 = inlined_call_operand.vmem [shape: bf16[5,2048], index: 2, kind: input, shape index: {}]
  %s3 = inlined_call_operand.vmem [shape: f32[1,32,5], index: 3, kind: output, shape index: {}]
  %s4 = sld [smem:[#allocation0]]
  $region30: #{simple_mlp_forward_packed.1} parent=0
    _
  %s6 = ssub.s32 1, %s4
  %s7 = scalar_select 0, %s6, %s4
  $region1: #{simple_mlp_forward_packed.1} parent=0
    #allocation2 [shape = 'u8[65536]{0}', space=vmem, size = 0x10000, scoped, tag = 'input window, operand 1, single buffered']
    #allocation3 [shape = 's32[1]{0}', space=sflag, size = 0x4, scoped, tag = 'scoped memory for simple_mlp_forward_packed.1']
    %8 = vsyncpa [#allocation3], 0
    // Predicated region
    $region2: #{simple_mlp_forward_packed.1} parent=1 // pred_check
      _
    $region3: #{simple_mlp_forward_packed.1} parent=1 // pred_check_branch
      %10 = sbr.rel (0) target = $region5
    $region4: #{simple_mlp_forward_packed.1} parent=1 // pred_region
      _
    $region5: #{simple_mlp_forward_packed.1} parent=1 // pred_fallthru
      _
    // Predicated region
    $region6: #{simple_mlp_forward_packed.1} parent=1 // pred_check
      _
    $region7: #{simple_mlp_forward_packed.1} parent=1 // pred_check_branch
      %12 = sbr.rel (0) target = $region9
    $region8: #{simple_mlp_forward_packed.1} parent=1 // pred_region
      %s13 = sadd.s32 0, 0
      %s14 = smul.u32 16, %s13
      %16 = vsyncadd [#allocation3], 0
      %s17 = smul.addr %s14, 4
      %s18 = scalar_lea.hbm %s1, %s17
      %s19 = sshll.u32 %s18, 4
      %s20 = int_to_ptr.hbm [resolvable:$true] %s19
      %s21 = sshll.u32 [#allocation2], 4
      %s22 = int_to_ptr.vmem [resolvable:$true] %s21
      %27 = dma.hbm_to_vmem [thread:$0]  %s20, 2048, %s22, [#allocation3], 1024, 1024, 64
    $region9: #{simple_mlp_forward_packed.1} parent=1 // pred_fallthru
      _
    // Predicated region
    $region10: #{simple_mlp_forward_packed.1} parent=1 // pred_check
      _
    $region11: #{simple_mlp_forward_packed.1} parent=1 // pred_check_branch
      %29 = sbr.rel (0) target = $region13
    $region12: #{simple_mlp_forward_packed.1} parent=1 // pred_region
      %s30 = sadd.s32 0, 0
      %s31 = smul.u32 16, %s30
      %p32 = scmp.lt.s32.totalorder %s31, 15
      %s33 = scalar_select %p32, %s31, 15
      %s34 = smul.addr %s33, 4
      %s35 = scalar_lea.vmem %s2, %s34
      %s36 = sadd.s32 0, 0
      %s37 = smul.u32 16, %s36
    $region13: #{simple_mlp_forward_packed.1} parent=1 // pred_fallthru
      _
    // Predicated region
    $region14: #{simple_mlp_forward_packed.1} parent=1 // pred_check
      _
    $region15: #{simple_mlp_forward_packed.1} parent=1 // pred_check_branch
      %39 = sbr.rel (0) target = $region17
    $region16: #{simple_mlp_forward_packed.1} parent=1 // pred_region
      %41 = dma.done [#allocation3], 2048
    $region17: #{simple_mlp_forward_packed.1} parent=1 // pred_fallthru
      _
    %s42 = sadd.s32 0, 0
    %s43 = smul.u32 16, %s42
    %p44 = scmp.lt.s32.totalorder %s43, 15
    %s45 = scalar_select %p44, %s43, 15
    %s46 = smul.addr %s45, 4
    %s47 = scalar_lea.vmem %s2, %s46
    %s48 = sadd.s32 0, 0
    %s49 = smul.u32 16, %s48
    %s50 = sadd.s32 0, 0
    %s51 = smul.u32 16, %s50
    %p52 = scmp.lt.s32.totalorder %s51, 15
    %s53 = scalar_select %p52, %s51, 15
    %s54 = smul.addr %s53, 4
    %s55 = scalar_lea.vmem %s2, %s54
    %s56 = sadd.s32 0, 0
    %s57 = smul.u32 16, %s56
    %p59 = scmp.eq.s32.totalorder 0, 0
    // Predicated region
    $region18: #{simple_mlp_forward_packed.1} parent=1 // pred_check
      %p60 = pneg %p59
    $region19: #{simple_mlp_forward_packed.1} parent=1 // pred_check_branch
      %62 = sbr.rel (%p60) target = $region21
    $region20: #{simple_mlp_forward_packed.1} parent=1 // pred_region
      %vm63 = vcmask 39936
      %64 = vst.msk [vmem:[%s3] sm:$0xff] %vm63, 0.0
      %65 = vst.msk [vmem:[%s3 + $0x8] sm:$0xff] %vm63, 0.0
      %66 = vst.msk [vmem:[%s3 + $0x10] sm:$0xff] %vm63, 0.0
      %67 = vst.msk [vmem:[%s3 + $0x18] sm:$0xff] %vm63, 0.0
    $region21: #{simple_mlp_forward_packed.1} parent=1 // pred_fallthru
      _
    %v68 = vld [vmem:[%s0] sm:$0xf]
    %v69 = vld [vmem:[%s0 + $0x4] sm:$0xf]
    %v70 = vld [vmem:[%s0 + $0x8] sm:$0xf]
    %v71 = vld [vmem:[%s0 + $0xc] sm:$0xf]
    %v72 = vld [vmem:[#allocation2] sm:$0xff]
    %v73 = vld [vmem:[#allocation2 + $0x8] sm:$0xff]
    %v74 = vld [vmem:[#allocation2 + $0x10] sm:$0xff]
    %v75 = vld [vmem:[#allocation2 + $0x18] sm:$0xff]
    %v76 = vld [vmem:[#allocation2 + $0x20] sm:$0xff]
    %v77 = vld [vmem:[#allocation2 + $0x28] sm:$0xff]
    %v78 = vld [vmem:[#allocation2 + $0x30] sm:$0xff]
    %v79 = vld [vmem:[#allocation2 + $0x38] sm:$0xff]
    %v80 = vld [vmem:[#allocation2 + $0x40] sm:$0x33]
    %v81 = vld [vmem:[#allocation2 + $0x48] sm:$0x33]
    %v82 = vld [vmem:[#allocation2 + $0x50] sm:$0x33]
    %v83 = vld [vmem:[#allocation2 + $0x58] sm:$0x33]
    %v84 = vld [vmem:[#allocation2 + $0x60] sm:$0x33]
    %v85 = vld [vmem:[#allocation2 + $0x68] sm:$0x33]
    %v86 = vld [vmem:[#allocation2 + $0x70] sm:$0x33]
    %v87 = vld [vmem:[#allocation2 + $0x78] sm:$0x33]
    %v92 = vunpack.c.l.b16 %v68
    %v93 = vunpack.c.l.b16 %v69
    %v94 = vunpack.c.l.b16 %v70
    %v95 = vunpack.c.l.b16 %v71
    %v96 = vpack.c.b16 %v93, %v92
    %v97 = vpack.c.b16 %v95, %v94
    %v114 = vunpack.c.l.b16 %v72
    %v115 = vunpack.c.h.b16 %v72
    %v116 = vunpack.c.l.b16 %v73
    %v117 = vunpack.c.h.b16 %v73
    %v118 = vunpack.c.l.b16 %v74
    %v119 = vunpack.c.h.b16 %v74
    %v120 = vunpack.c.l.b16 %v75
    %v121 = vunpack.c.h.b16 %v75
    %v122 = vunpack.c.l.b16 %v76
    %v123 = vunpack.c.h.b16 %v76
    %v124 = vunpack.c.l.b16 %v77
    %v125 = vunpack.c.h.b16 %v77
    %v126 = vunpack.c.l.b16 %v78
    %v127 = vunpack.c.h.b16 %v78
    %v128 = vunpack.c.l.b16 %v79
    %v129 = vunpack.c.h.b16 %v79
    %v130 = vunpack.c.l.b16 %v80
    %v131 = vunpack.c.h.b16 %v80
    %v132 = vunpack.c.l.b16 %v81
    %v133 = vunpack.c.h.b16 %v81
    %v134 = vunpack.c.l.b16 %v82
    %v135 = vunpack.c.h.b16 %v82
    %v136 = vunpack.c.l.b16 %v83
    %v137 = vunpack.c.h.b16 %v83
    %v138 = vunpack.c.l.b16 %v84
    %v139 = vunpack.c.h.b16 %v84
    %v140 = vunpack.c.l.b16 %v85
    %v141 = vunpack.c.h.b16 %v85
    %v142 = vunpack.c.l.b16 %v86
    %v143 = vunpack.c.h.b16 %v86
    %v144 = vunpack.c.l.b16 %v87
    %v145 = vunpack.c.h.b16 %v87
    %v146 = vpack.c.b16 %v130, %v114
    %v147 = vpack.c.b16 %v131, %v115
    %v148 = vpack.c.b16 %v132, %v116
    %v149 = vpack.c.b16 %v133, %v117
    %v150 = vpack.c.b16 %v134, %v118
    %v151 = vpack.c.b16 %v135, %v119
    %v152 = vpack.c.b16 %v136, %v120
    %v153 = vpack.c.b16 %v137, %v121
    %v154 = vpack.c.b16 %v138, %v122
    %v155 = vpack.c.b16 %v139, %v123
    %v156 = vpack.c.b16 %v140, %v124
    %v157 = vpack.c.b16 %v141, %v125
    %v158 = vpack.c.b16 %v142, %v126
    %v159 = vpack.c.b16 %v143, %v127
    %v160 = vpack.c.b16 %v144, %v128
    %v161 = vpack.c.b16 %v145, %v129
    %vm162 = vcmask 89088
    %v164 = vsel %vm162, %v96, 0
    %v167 = vsel %vm162, %v97, 0
    %vm169 = vcmask 1044480
    %vm170 = vcmask 1045504
    %v171 = vsel %vm169, 4294967295, 65535
    %v172 = vsel %vm170, %v171, 0
    %v174 = vand.u32 %v146, %v172
    %v177 = vand.u32 %v147, %v172
    %v180 = vand.u32 %v148, %v172
    %v183 = vand.u32 %v149, %v172
    %v186 = vand.u32 %v150, %v172
    %v189 = vand.u32 %v151, %v172
    %v192 = vand.u32 %v152, %v172
    %v195 = vand.u32 %v153, %v172
    %v198 = vand.u32 %v154, %v172
    %v201 = vand.u32 %v155, %v172
    %v204 = vand.u32 %v156, %v172
    %v207 = vand.u32 %v157, %v172
    %v210 = vand.u32 %v158, %v172
    %v213 = vand.u32 %v159, %v172
    %v216 = vand.u32 %v160, %v172
    %v219 = vand.u32 %v161, %v172
    %221 = vmatpush.bf16.msra.mxu0 0
    %222 = vmatpush.bf16.msra.mxu0 0
    %223 = vmatpush.bf16.msra.mxu0 0
    %224 = vmatpush.bf16.msra.mxu0 0
    %225 = vmatpush.bf16.msra.mxu0 0
    %226 = vmatpush.bf16.msra.mxu0 0
    %227 = vmatpush.bf16.msra.mxu0 0
    %228 = vmatpush.bf16.msra.mxu0 %v174
    %229 = vmatmul.bf16.gmra.mxu0 %v164
    %v230 = vpop.f32.mrf.mxu0
    %v231 = vadd.f32 0.0, %v230
    %v232 = vpop.f32.mrf.mxu0
    %v233 = vadd.f32 0.0, %v232
    %234 = vmatmul.bf16.gmra.mxu0 %v167
    %v235 = vpop.f32.mrf.mxu0
    %v236 = vadd.f32 0.0, %v235
    %v237 = vpop.f32.mrf.mxu0
    %v238 = vadd.f32 0.0, %v237
    %239 = vdwg.mxu0
    %240 = vmatpush.bf16.msra.mxu0 0
    %241 = vmatpush.bf16.msra.mxu0 0
    %242 = vmatpush.bf16.msra.mxu0 0
    %243 = vmatpush.bf16.msra.mxu0 0
    %244 = vmatpush.bf16.msra.mxu0 0
    %245 = vmatpush.bf16.msra.mxu0 0
    %246 = vmatpush.bf16.msra.mxu0 0
    %247 = vmatpush.bf16.msra.mxu0 %v177
    %248 = vmatmul.bf16.gmra.mxu0 %v164
    %v249 = vpop.f32.mrf.mxu0
    %v250 = vadd.f32 0.0, %v249
    %v251 = vpop.f32.mrf.mxu0
    %v252 = vadd.f32 0.0, %v251
    %253 = vmatmul.bf16.gmra.mxu0 %v167
    %v254 = vpop.f32.mrf.mxu0
    %v255 = vadd.f32 0.0, %v254
    %v256 = vpop.f32.mrf.mxu0
    %v257 = vadd.f32 0.0, %v256
    %258 = vdwg.mxu0
    %259 = vmatpush.bf16.msra.mxu0 0
    %260 = vmatpush.bf16.msra.mxu0 0
    %261 = vmatpush.bf16.msra.mxu0 0
    %262 = vmatpush.bf16.msra.mxu0 0
    %263 = vmatpush.bf16.msra.mxu0 0
    %264 = vmatpush.bf16.msra.mxu0 0
    %265 = vmatpush.bf16.msra.mxu0 0
    %266 = vmatpush.bf16.msra.mxu0 %v180
    %267 = vmatmul.bf16.gmra.mxu0 %v164
    %v268 = vpop.f32.mrf.mxu0
    %v269 = vadd.f32 0.0, %v268
    %v270 = vpop.f32.mrf.mxu0
    %v271 = vadd.f32 0.0, %v270
    %272 = vmatmul.bf16.gmra.mxu0 %v167
    %v273 = vpop.f32.mrf.mxu0
    %v274 = vadd.f32 0.0, %v273
    %v275 = vpop.f32.mrf.mxu0
    %v276 = vadd.f32 0.0, %v275
    %277 = vdwg.mxu0
    %278 = vmatpush.bf16.msra.mxu0 0
    %279 = vmatpush.bf16.msra.mxu0 0
    %280 = vmatpush.bf16.msra.mxu0 0
    %281 = vmatpush.bf16.msra.mxu0 0
    %282 = vmatpush.bf16.msra.mxu0 0
    %283 = vmatpush.bf16.msra.mxu0 0
    %284 = vmatpush.bf16.msra.mxu0 0
    %285 = vmatpush.bf16.msra.mxu0 %v183
    %286 = vmatmul.bf16.gmra.mxu0 %v164
    %v287 = vpop.f32.mrf.mxu0
    %v288 = vadd.f32 0.0, %v287
    %v289 = vpop.f32.mrf.mxu0
    %v290 = vadd.f32 0.0, %v289
    %291 = vmatmul.bf16.gmra.mxu0 %v167
    %v292 = vpop.f32.mrf.mxu0
    %v293 = vadd.f32 0.0, %v292
    %v294 = vpop.f32.mrf.mxu0
    %v295 = vadd.f32 0.0, %v294
    %296 = vdwg.mxu0
    %297 = vmatpush.bf16.msra.mxu0 0
    %298 = vmatpush.bf16.msra.mxu0 0
    %299 = vmatpush.bf16.msra.mxu0 0
    %300 = vmatpush.bf16.msra.mxu0 0
    %301 = vmatpush.bf16.msra.mxu0 0
    %302 = vmatpush.bf16.msra.mxu0 0
    %303 = vmatpush.bf16.msra.mxu0 0
    %304 = vmatpush.bf16.msra.mxu0 %v186
    %305 = vmatmul.bf16.gmra.mxu0 %v164
    %v306 = vpop.f32.mrf.mxu0
    %v307 = vadd.f32 0.0, %v306
    %v308 = vpop.f32.mrf.mxu0
    %v309 = vadd.f32 0.0, %v308
    %310 = vmatmul.bf16.gmra.mxu0 %v167
    %v311 = vpop.f32.mrf.mxu0
    %v312 = vadd.f32 0.0, %v311
    %v313 = vpop.f32.mrf.mxu0
    %v314 = vadd.f32 0.0, %v313
    %315 = vdwg.mxu0
    %316 = vmatpush.bf16.msra.mxu0 0
    %317 = vmatpush.bf16.msra.mxu0 0
    %318 = vmatpush.bf16.msra.mxu0 0
    %319 = vmatpush.bf16.msra.mxu0 0
    %320 = vmatpush.bf16.msra.mxu0 0
    %321 = vmatpush.bf16.msra.mxu0 0
    %322 = vmatpush.bf16.msra.mxu0 0
    %323 = vmatpush.bf16.msra.mxu0 %v189
    %324 = vmatmul.bf16.gmra.mxu0 %v164
    %v325 = vpop.f32.mrf.mxu0
    %v326 = vadd.f32 0.0, %v325
    %v327 = vpop.f32.mrf.mxu0
    %v328 = vadd.f32 0.0, %v327
    %329 = vmatmul.bf16.gmra.mxu0 %v167
    %v330 = vpop.f32.mrf.mxu0
    %v331 = vadd.f32 0.0, %v330
    %v332 = vpop.f32.mrf.mxu0
    %v333 = vadd.f32 0.0, %v332
    %334 = vdwg.mxu0
    %335 = vmatpush.bf16.msra.mxu0 0
    %336 = vmatpush.bf16.msra.mxu0 0
    %337 = vmatpush.bf16.msra.mxu0 0
    %338 = vmatpush.bf16.msra.mxu0 0
    %339 = vmatpush.bf16.msra.mxu0 0
    %340 = vmatpush.bf16.msra.mxu0 0
    %341 = vmatpush.bf16.msra.mxu0 0
    %342 = vmatpush.bf16.msra.mxu0 %v192
    %343 = vmatmul.bf16.gmra.mxu0 %v164
    %v344 = vpop.f32.mrf.mxu0
    %v345 = vadd.f32 0.0, %v344
    %v346 = vpop.f32.mrf.mxu0
    %v347 = vadd.f32 0.0, %v346
    %348 = vmatmul.bf16.gmra.mxu0 %v167
    %v349 = vpop.f32.mrf.mxu0
    %v350 = vadd.f32 0.0, %v349
    %v351 = vpop.f32.mrf.mxu0
    %v352 = vadd.f32 0.0, %v351
    %353 = vdwg.mxu0
    %354 = vmatpush.bf16.msra.mxu0 0
    %355 = vmatpush.bf16.msra.mxu0 0
    %356 = vmatpush.bf16.msra.mxu0 0
    %357 = vmatpush.bf16.msra.mxu0 0
    %358 = vmatpush.bf16.msra.mxu0 0
    %359 = vmatpush.bf16.msra.mxu0 0
    %360 = vmatpush.bf16.msra.mxu0 0
    %361 = vmatpush.bf16.msra.mxu0 %v195
    %362 = vmatmul.bf16.gmra.mxu0 %v164
    %v363 = vpop.f32.mrf.mxu0
    %v364 = vadd.f32 0.0, %v363
    %v365 = vpop.f32.mrf.mxu0
    %v366 = vadd.f32 0.0, %v365
    %367 = vmatmul.bf16.gmra.mxu0 %v167
    %v368 = vpop.f32.mrf.mxu0
    %v369 = vadd.f32 0.0, %v368
    %v370 = vpop.f32.mrf.mxu0
    %v371 = vadd.f32 0.0, %v370
    %372 = vdwg.mxu0
    %373 = vmatpush.bf16.msra.mxu0 0
    %374 = vmatpush.bf16.msra.mxu0 0
    %375 = vmatpush.bf16.msra.mxu0 0
    %376 = vmatpush.bf16.msra.mxu0 0
    %377 = vmatpush.bf16.msra.mxu0 0
    %378 = vmatpush.bf16.msra.mxu0 0
    %379 = vmatpush.bf16.msra.mxu0 0
    %380 = vmatpush.bf16.msra.mxu0 %v198
    %381 = vmatmul.bf16.gmra.mxu0 %v164
    %v382 = vpop.f32.mrf.mxu0
    %v383 = vadd.f32 0.0, %v382
    %v384 = vpop.f32.mrf.mxu0
    %v385 = vadd.f32 0.0, %v384
    %386 = vmatmul.bf16.gmra.mxu0 %v167
    %v387 = vpop.f32.mrf.mxu0
    %v388 = vadd.f32 0.0, %v387
    %v389 = vpop.f32.mrf.mxu0
    %v390 = vadd.f32 0.0, %v389
    %391 = vdwg.mxu0
    %392 = vmatpush.bf16.msra.mxu0 0
    %393 = vmatpush.bf16.msra.mxu0 0
    %394 = vmatpush.bf16.msra.mxu0 0
    %395 = vmatpush.bf16.msra.mxu0 0
    %396 = vmatpush.bf16.msra.mxu0 0
    %397 = vmatpush.bf16.msra.mxu0 0
    %398 = vmatpush.bf16.msra.mxu0 0
    %399 = vmatpush.bf16.msra.mxu0 %v201
    %400 = vmatmul.bf16.gmra.mxu0 %v164
    %v401 = vpop.f32.mrf.mxu0
    %v402 = vadd.f32 0.0, %v401
    %v403 = vpop.f32.mrf.mxu0
    %v404 = vadd.f32 0.0, %v403
    %405 = vmatmul.bf16.gmra.mxu0 %v167
    %v406 = vpop.f32.mrf.mxu0
    %v407 = vadd.f32 0.0, %v406
    %v408 = vpop.f32.mrf.mxu0
    %v409 = vadd.f32 0.0, %v408
    %410 = vdwg.mxu0
    %411 = vmatpush.bf16.msra.mxu0 0
    %412 = vmatpush.bf16.msra.mxu0 0
    %413 = vmatpush.bf16.msra.mxu0 0
    %414 = vmatpush.bf16.msra.mxu0 0
    %415 = vmatpush.bf16.msra.mxu0 0
    %416 = vmatpush.bf16.msra.mxu0 0
    %417 = vmatpush.bf16.msra.mxu0 0
    %418 = vmatpush.bf16.msra.mxu0 %v204
    %419 = vmatmul.bf16.gmra.mxu0 %v164
    %v420 = vpop.f32.mrf.mxu0
    %v421 = vadd.f32 0.0, %v420
    %v422 = vpop.f32.mrf.mxu0
    %v423 = vadd.f32 0.0, %v422
    %424 = vmatmul.bf16.gmra.mxu0 %v167
    %v425 = vpop.f32.mrf.mxu0
    %v426 = vadd.f32 0.0, %v425
    %v427 = vpop.f32.mrf.mxu0
    %v428 = vadd.f32 0.0, %v427
    %429 = vdwg.mxu0
    %430 = vmatpush.bf16.msra.mxu0 0
    %431 = vmatpush.bf16.msra.mxu0 0
    %432 = vmatpush.bf16.msra.mxu0 0
    %433 = vmatpush.bf16.msra.mxu0 0
    %434 = vmatpush.bf16.msra.mxu0 0
    %435 = vmatpush.bf16.msra.mxu0 0
    %436 = vmatpush.bf16.msra.mxu0 0
    %437 = vmatpush.bf16.msra.mxu0 %v207
    %438 = vmatmul.bf16.gmra.mxu0 %v164
    %v439 = vpop.f32.mrf.mxu0
    %v440 = vadd.f32 0.0, %v439
    %v441 = vpop.f32.mrf.mxu0
    %v442 = vadd.f32 0.0, %v441
    %443 = vmatmul.bf16.gmra.mxu0 %v167
    %v444 = vpop.f32.mrf.mxu0
    %v445 = vadd.f32 0.0, %v444
    %v446 = vpop.f32.mrf.mxu0
    %v447 = vadd.f32 0.0, %v446
    %448 = vdwg.mxu0
    %449 = vmatpush.bf16.msra.mxu0 0
    %450 = vmatpush.bf16.msra.mxu0 0
    %451 = vmatpush.bf16.msra.mxu0 0
    %452 = vmatpush.bf16.msra.mxu0 0
    %453 = vmatpush.bf16.msra.mxu0 0
    %454 = vmatpush.bf16.msra.mxu0 0
    %455 = vmatpush.bf16.msra.mxu0 0
    %456 = vmatpush.bf16.msra.mxu0 %v210
    %457 = vmatmul.bf16.gmra.mxu0 %v164
    %v458 = vpop.f32.mrf.mxu0
    %v459 = vadd.f32 0.0, %v458
    %v460 = vpop.f32.mrf.mxu0
    %v461 = vadd.f32 0.0, %v460
    %462 = vmatmul.bf16.gmra.mxu0 %v167
    %v463 = vpop.f32.mrf.mxu0
    %v464 = vadd.f32 0.0, %v463
    %v465 = vpop.f32.mrf.mxu0
    %v466 = vadd.f32 0.0, %v465
    %467 = vdwg.mxu0
    %468 = vmatpush.bf16.msra.mxu0 0
    %469 = vmatpush.bf16.msra.mxu0 0
    %470 = vmatpush.bf16.msra.mxu0 0
    %471 = vmatpush.bf16.msra.mxu0 0
    %472 = vmatpush.bf16.msra.mxu0 0
    %473 = vmatpush.bf16.msra.mxu0 0
    %474 = vmatpush.bf16.msra.mxu0 0
    %475 = vmatpush.bf16.msra.mxu0 %v213
    %476 = vmatmul.bf16.gmra.mxu0 %v164
    %v477 = vpop.f32.mrf.mxu0
    %v478 = vadd.f32 0.0, %v477
    %v479 = vpop.f32.mrf.mxu0
    %v480 = vadd.f32 0.0, %v479
    %481 = vmatmul.bf16.gmra.mxu0 %v167
    %v482 = vpop.f32.mrf.mxu0
    %v483 = vadd.f32 0.0, %v482
    %v484 = vpop.f32.mrf.mxu0
    %v485 = vadd.f32 0.0, %v484
    %486 = vdwg.mxu0
    %487 = vmatpush.bf16.msra.mxu0 0
    %488 = vmatpush.bf16.msra.mxu0 0
    %489 = vmatpush.bf16.msra.mxu0 0
    %490 = vmatpush.bf16.msra.mxu0 0
    %491 = vmatpush.bf16.msra.mxu0 0
    %492 = vmatpush.bf16.msra.mxu0 0
    %493 = vmatpush.bf16.msra.mxu0 0
    %494 = vmatpush.bf16.msra.mxu0 %v216
    %495 = vmatmul.bf16.gmra.mxu0 %v164
    %v496 = vpop.f32.mrf.mxu0
    %v497 = vadd.f32 0.0, %v496
    %v498 = vpop.f32.mrf.mxu0
    %v499 = vadd.f32 0.0, %v498
    %500 = vmatmul.bf16.gmra.mxu0 %v167
    %v501 = vpop.f32.mrf.mxu0
    %v502 = vadd.f32 0.0, %v501
    %v503 = vpop.f32.mrf.mxu0
    %v504 = vadd.f32 0.0, %v503
    %505 = vdwg.mxu0
    %506 = vmatpush.bf16.msra.mxu0 0
    %507 = vmatpush.bf16.msra.mxu0 0
    %508 = vmatpush.bf16.msra.mxu0 0
    %509 = vmatpush.bf16.msra.mxu0 0
    %510 = vmatpush.bf16.msra.mxu0 0
    %511 = vmatpush.bf16.msra.mxu0 0
    %512 = vmatpush.bf16.msra.mxu0 0
    %513 = vmatpush.bf16.msra.mxu0 %v219
    %514 = vmatmul.bf16.gmra.mxu0 %v164
    %v515 = vpop.f32.mrf.mxu0
    %v516 = vadd.f32 0.0, %v515
    %v517 = vpop.f32.mrf.mxu0
    %v518 = vadd.f32 0.0, %v517
    %519 = vmatmul.bf16.gmra.mxu0 %v167
    %v520 = vpop.f32.mrf.mxu0
    %v521 = vadd.f32 0.0, %v520
    %v522 = vpop.f32.mrf.mxu0
    %v523 = vadd.f32 0.0, %v522
    %524 = vdwg.mxu0
    %v525 = vmax.f32 %v231, 0.0
    %v526 = vmax.f32 %v250, 0.0
    %v527 = vmax.f32 %v269, 0.0
    %v528 = vmax.f32 %v288, 0.0
    %v529 = vmax.f32 %v307, 0.0
    %v530 = vmax.f32 %v326, 0.0
    %v531 = vmax.f32 %v345, 0.0
    %v532 = vmax.f32 %v364, 0.0
    %v533 = vmax.f32 %v383, 0.0
    %v534 = vmax.f32 %v402, 0.0
    %v535 = vmax.f32 %v421, 0.0
    %v536 = vmax.f32 %v440, 0.0
    %v537 = vmax.f32 %v459, 0.0
    %v538 = vmax.f32 %v478, 0.0
    %v539 = vmax.f32 %v497, 0.0
    %v540 = vmax.f32 %v516, 0.0
    %v541 = vmax.f32 %v233, 0.0
    %v542 = vmax.f32 %v252, 0.0
    %v543 = vmax.f32 %v271, 0.0
    %v544 = vmax.f32 %v290, 0.0
    %v545 = vmax.f32 %v309, 0.0
    %v546 = vmax.f32 %v328, 0.0
    %v547 = vmax.f32 %v347, 0.0
    %v548 = vmax.f32 %v366, 0.0
    %v549 = vmax.f32 %v385, 0.0
    %v550 = vmax.f32 %v404, 0.0
    %v551 = vmax.f32 %v423, 0.0
    %v552 = vmax.f32 %v442, 0.0
    %v553 = vmax.f32 %v461, 0.0
    %v554 = vmax.f32 %v480, 0.0
    %v555 = vmax.f32 %v499, 0.0
    %v556 = vmax.f32 %v518, 0.0
    %v557 = vmax.f32 %v236, 0.0
    %v558 = vmax.f32 %v255, 0.0
    %v559 = vmax.f32 %v274, 0.0
    %v560 = vmax.f32 %v293, 0.0
    %v561 = vmax.f32 %v312, 0.0
    %v562 = vmax.f32 %v331, 0.0
    %v563 = vmax.f32 %v350, 0.0
    %v564 = vmax.f32 %v369, 0.0
    %v565 = vmax.f32 %v388, 0.0
    %v566 = vmax.f32 %v407, 0.0
    %v567 = vmax.f32 %v426, 0.0
    %v568 = vmax.f32 %v445, 0.0
    %v569 = vmax.f32 %v464, 0.0
    %v570 = vmax.f32 %v483, 0.0
    %v571 = vmax.f32 %v502, 0.0
    %v572 = vmax.f32 %v521, 0.0
    %v573 = vmax.f32 %v238, 0.0
    %v574 = vmax.f32 %v257, 0.0
    %v575 = vmax.f32 %v276, 0.0
    %v576 = vmax.f32 %v295, 0.0
    %v577 = vmax.f32 %v314, 0.0
    %v578 = vmax.f32 %v333, 0.0
    %v579 = vmax.f32 %v352, 0.0
    %v580 = vmax.f32 %v371, 0.0
    %v581 = vmax.f32 %v390, 0.0
    %v582 = vmax.f32 %v409, 0.0
    %v583 = vmax.f32 %v428, 0.0
    %v584 = vmax.f32 %v447, 0.0
    %v585 = vmax.f32 %v466, 0.0
    %v586 = vmax.f32 %v485, 0.0
    %v587 = vmax.f32 %v504, 0.0
    %v588 = vmax.f32 %v523, 0.0
    %v589 = vpack.c.bf16 %v541, %v525
    %v590 = vpack.c.bf16 %v542, %v526
    %v591 = vpack.c.bf16 %v543, %v527
    %v592 = vpack.c.bf16 %v544, %v528
    %v593 = vpack.c.bf16 %v545, %v529
    %v594 = vpack.c.bf16 %v546, %v530
    %v595 = vpack.c.bf16 %v547, %v531
    %v596 = vpack.c.bf16 %v548, %v532
    %v597 = vpack.c.bf16 %v549, %v533
    %v598 = vpack.c.bf16 %v550, %v534
    %v599 = vpack.c.bf16 %v551, %v535
    %v600 = vpack.c.bf16 %v552, %v536
    %v601 = vpack.c.bf16 %v553, %v537
    %v602 = vpack.c.bf16 %v554, %v538
    %v603 = vpack.c.bf16 %v555, %v539
    %v604 = vpack.c.bf16 %v556, %v540
    %v605 = vpack.c.bf16 %v573, %v557
    %v606 = vpack.c.bf16 %v574, %v558
    %v607 = vpack.c.bf16 %v575, %v559
    %v608 = vpack.c.bf16 %v576, %v560
    %v609 = vpack.c.bf16 %v577, %v561
    %v610 = vpack.c.bf16 %v578, %v562
    %v611 = vpack.c.bf16 %v579, %v563
    %v612 = vpack.c.bf16 %v580, %v564
    %v613 = vpack.c.bf16 %v581, %v565
    %v614 = vpack.c.bf16 %v582, %v566
    %v615 = vpack.c.bf16 %v583, %v567
    %v616 = vpack.c.bf16 %v584, %v568
    %v617 = vpack.c.bf16 %v585, %v569
    %v618 = vpack.c.bf16 %v586, %v570
    %v619 = vpack.c.bf16 %v587, %v571
    %v620 = vpack.c.bf16 %v588, %v572
    %v621 = vld [vmem:[%s3] sm:$0xff]
    %v622 = vld [vmem:[%s3 + $0x8] sm:$0xff]
    %v623 = vld [vmem:[%s3 + $0x10] sm:$0xff]
    %v624 = vld [vmem:[%s3 + $0x18] sm:$0xff]
    %v625 = vld [vmem:[%s55] sm:$0x77]
    %v626 = vld [vmem:[%s55 + $0x8] sm:$0x77]
    %v627 = vld [vmem:[%s55 + $0x10] sm:$0x77]
    %v628 = vld [vmem:[%s55 + $0x18] sm:$0x77]
    %v629 = vld [vmem:[%s55 + $0x20] sm:$0x77]
    %v630 = vld [vmem:[%s55 + $0x28] sm:$0x77]
    %v631 = vld [vmem:[%s55 + $0x30] sm:$0x77]
    %v632 = vld [vmem:[%s55 + $0x38] sm:$0x77]
    %v641 = vunpack.c.l.b16 %v625
    %v642 = vunpack.c.h.b16 %v625
    %v643 = vunpack.c.l.b16 %v626
    %v644 = vunpack.c.h.b16 %v626
    %v645 = vunpack.c.l.b16 %v627
    %v646 = vunpack.c.h.b16 %v627
    %v647 = vunpack.c.l.b16 %v628
    %v648 = vunpack.c.h.b16 %v628
    %v649 = vunpack.c.l.b16 %v629
    %v650 = vunpack.c.h.b16 %v629
    %v651 = vunpack.c.l.b16 %v630
    %v652 = vunpack.c.h.b16 %v630
    %v653 = vunpack.c.l.b16 %v631
    %v654 = vunpack.c.h.b16 %v631
    %v655 = vunpack.c.l.b16 %v632
    %v656 = vunpack.c.h.b16 %v632
    %v657 = vpack.c.b16 %v641, %v641
    %v658 = vpack.c.b16 %v642, %v642
    %v659 = vpack.c.b16 %v643, %v643
    %v660 = vpack.c.b16 %v644, %v644
    %v661 = vpack.c.b16 %v645, %v645
    %v662 = vpack.c.b16 %v646, %v646
    %v663 = vpack.c.b16 %v647, %v647
    %v664 = vpack.c.b16 %v648, %v648
    %v665 = vpack.c.b16 %v649, %v649
    %v666 = vpack.c.b16 %v650, %v650
    %v667 = vpack.c.b16 %v651, %v651
    %v668 = vpack.c.b16 %v652, %v652
    %v669 = vpack.c.b16 %v653, %v653
    %v670 = vpack.c.b16 %v654, %v654
    %v671 = vpack.c.b16 %v655, %v655
    %v672 = vpack.c.b16 %v656, %v656
    %689 = vmatpush.bf16.xpose.msra.mxu0 0
    %690 = vmatpush.bf16.xpose.msra.mxu0 0
    %691 = vmatpush.bf16.xpose.msra.mxu0 0
    %692 = vmatpush.bf16.xpose.msra.mxu0 0
    %693 = vmatpush.bf16.xpose.msra.mxu0 0
    %694 = vmatpush.bf16.xpose.msra.mxu0 0
    %695 = vmatpush.bf16.xpose.msra.mxu0 0
    %696 = vmatpush.bf16.xpose.msra.mxu0 %v657
    %697 = vmatmul.bf16.gmra.mxu0 %v589
    %v698 = vpop.f32.mrf.mxu0
    %v699 = vadd.f32 0.0, %v698
    %v700 = vpop.f32.mrf.mxu0
    %v701 = vadd.f32 0.0, %v700
    %702 = vmatmul.bf16.gmra.mxu0 %v605
    %v703 = vpop.f32.mrf.mxu0
    %v704 = vadd.f32 0.0, %v703
    %v705 = vpop.f32.mrf.mxu0
    %v706 = vadd.f32 0.0, %v705
    %707 = vdwg.mxu0
    %708 = vmatpush.bf16.xpose.msra.mxu0 0
    %709 = vmatpush.bf16.xpose.msra.mxu0 0
    %710 = vmatpush.bf16.xpose.msra.mxu0 0
    %711 = vmatpush.bf16.xpose.msra.mxu0 0
    %712 = vmatpush.bf16.xpose.msra.mxu0 0
    %713 = vmatpush.bf16.xpose.msra.mxu0 0
    %714 = vmatpush.bf16.xpose.msra.mxu0 0
    %715 = vmatpush.bf16.xpose.msra.mxu0 %v658
    %716 = vmatmul.bf16.gmra.mxu0 %v590
    %v717 = vpop.f32.mrf.mxu0
    %v718 = vadd.f32 %v699, %v717
    %v719 = vpop.f32.mrf.mxu0
    %v720 = vadd.f32 %v701, %v719
    %721 = vmatmul.bf16.gmra.mxu0 %v606
    %v722 = vpop.f32.mrf.mxu0
    %v723 = vadd.f32 %v704, %v722
    %v724 = vpop.f32.mrf.mxu0
    %v725 = vadd.f32 %v706, %v724
    %726 = vdwg.mxu0
    %727 = vmatpush.bf16.xpose.msra.mxu0 0
    %728 = vmatpush.bf16.xpose.msra.mxu0 0
    %729 = vmatpush.bf16.xpose.msra.mxu0 0
    %730 = vmatpush.bf16.xpose.msra.mxu0 0
    %731 = vmatpush.bf16.xpose.msra.mxu0 0
    %732 = vmatpush.bf16.xpose.msra.mxu0 0
    %733 = vmatpush.bf16.xpose.msra.mxu0 0
    %734 = vmatpush.bf16.xpose.msra.mxu0 %v659
    %735 = vmatmul.bf16.gmra.mxu0 %v591
    %v736 = vpop.f32.mrf.mxu0
    %v737 = vadd.f32 %v718, %v736
    %v738 = vpop.f32.mrf.mxu0
    %v739 = vadd.f32 %v720, %v738
    %740 = vmatmul.bf16.gmra.mxu0 %v607
    %v741 = vpop.f32.mrf.mxu0
    %v742 = vadd.f32 %v723, %v741
    %v743 = vpop.f32.mrf.mxu0
    %v744 = vadd.f32 %v725, %v743
    %745 = vdwg.mxu0
    %746 = vmatpush.bf16.xpose.msra.mxu0 0
    %747 = vmatpush.bf16.xpose.msra.mxu0 0
    %748 = vmatpush.bf16.xpose.msra.mxu0 0
    %749 = vmatpush.bf16.xpose.msra.mxu0 0
    %750 = vmatpush.bf16.xpose.msra.mxu0 0
    %751 = vmatpush.bf16.xpose.msra.mxu0 0
    %752 = vmatpush.bf16.xpose.msra.mxu0 0
    %753 = vmatpush.bf16.xpose.msra.mxu0 %v660
    %754 = vmatmul.bf16.gmra.mxu0 %v592
    %v755 = vpop.f32.mrf.mxu0
    %v756 = vadd.f32 %v737, %v755
    %v757 = vpop.f32.mrf.mxu0
    %v758 = vadd.f32 %v739, %v757
    %759 = vmatmul.bf16.gmra.mxu0 %v608
    %v760 = vpop.f32.mrf.mxu0
    %v761 = vadd.f32 %v742, %v760
    %v762 = vpop.f32.mrf.mxu0
    %v763 = vadd.f32 %v744, %v762
    %764 = vdwg.mxu0
    %765 = vmatpush.bf16.xpose.msra.mxu0 0
    %766 = vmatpush.bf16.xpose.msra.mxu0 0
    %767 = vmatpush.bf16.xpose.msra.mxu0 0
    %768 = vmatpush.bf16.xpose.msra.mxu0 0
    %769 = vmatpush.bf16.xpose.msra.mxu0 0
    %770 = vmatpush.bf16.xpose.msra.mxu0 0
    %771 = vmatpush.bf16.xpose.msra.mxu0 0
    %772 = vmatpush.bf16.xpose.msra.mxu0 %v661
    %773 = vmatmul.bf16.gmra.mxu0 %v593
    %v774 = vpop.f32.mrf.mxu0
    %v775 = vadd.f32 %v756, %v774
    %v776 = vpop.f32.mrf.mxu0
    %v777 = vadd.f32 %v758, %v776
    %778 = vmatmul.bf16.gmra.mxu0 %v609
    %v779 = vpop.f32.mrf.mxu0
    %v780 = vadd.f32 %v761, %v779
    %v781 = vpop.f32.mrf.mxu0
    %v782 = vadd.f32 %v763, %v781
    %783 = vdwg.mxu0
    %784 = vmatpush.bf16.xpose.msra.mxu0 0
    %785 = vmatpush.bf16.xpose.msra.mxu0 0
    %786 = vmatpush.bf16.xpose.msra.mxu0 0
    %787 = vmatpush.bf16.xpose.msra.mxu0 0
    %788 = vmatpush.bf16.xpose.msra.mxu0 0
    %789 = vmatpush.bf16.xpose.msra.mxu0 0
    %790 = vmatpush.bf16.xpose.msra.mxu0 0
    %791 = vmatpush.bf16.xpose.msra.mxu0 %v662
    %792 = vmatmul.bf16.gmra.mxu0 %v594
    %v793 = vpop.f32.mrf.mxu0
    %v794 = vadd.f32 %v775, %v793
    %v795 = vpop.f32.mrf.mxu0
    %v796 = vadd.f32 %v777, %v795
    %797 = vmatmul.bf16.gmra.mxu0 %v610
    %v798 = vpop.f32.mrf.mxu0
    %v799 = vadd.f32 %v780, %v798
    %v800 = vpop.f32.mrf.mxu0
    %v801 = vadd.f32 %v782, %v800
    %802 = vdwg.mxu0
    %803 = vmatpush.bf16.xpose.msra.mxu0 0
    %804 = vmatpush.bf16.xpose.msra.mxu0 0
    %805 = vmatpush.bf16.xpose.msra.mxu0 0
    %806 = vmatpush.bf16.xpose.msra.mxu0 0
    %807 = vmatpush.bf16.xpose.msra.mxu0 0
    %808 = vmatpush.bf16.xpose.msra.mxu0 0
    %809 = vmatpush.bf16.xpose.msra.mxu0 0
    %810 = vmatpush.bf16.xpose.msra.mxu0 %v663
    %811 = vmatmul.bf16.gmra.mxu0 %v595
    %v812 = vpop.f32.mrf.mxu0
    %v813 = vadd.f32 %v794, %v812
    %v814 = vpop.f32.mrf.mxu0
    %v815 = vadd.f32 %v796, %v814
    %816 = vmatmul.bf16.gmra.mxu0 %v611
    %v817 = vpop.f32.mrf.mxu0
    %v818 = vadd.f32 %v799, %v817
    %v819 = vpop.f32.mrf.mxu0
    %v820 = vadd.f32 %v801, %v819
    %821 = vdwg.mxu0
    %822 = vmatpush.bf16.xpose.msra.mxu0 0
    %823 = vmatpush.bf16.xpose.msra.mxu0 0
    %824 = vmatpush.bf16.xpose.msra.mxu0 0
    %825 = vmatpush.bf16.xpose.msra.mxu0 0
    %826 = vmatpush.bf16.xpose.msra.mxu0 0
    %827 = vmatpush.bf16.xpose.msra.mxu0 0
    %828 = vmatpush.bf16.xpose.msra.mxu0 0
    %829 = vmatpush.bf16.xpose.msra.mxu0 %v664
    %830 = vmatmul.bf16.gmra.mxu0 %v596
    %v831 = vpop.f32.mrf.mxu0
    %v832 = vadd.f32 %v813, %v831
    %v833 = vpop.f32.mrf.mxu0
    %v834 = vadd.f32 %v815, %v833
    %835 = vmatmul.bf16.gmra.mxu0 %v612
    %v836 = vpop.f32.mrf.mxu0
    %v837 = vadd.f32 %v818, %v836
    %v838 = vpop.f32.mrf.mxu0
    %v839 = vadd.f32 %v820, %v838
    %840 = vdwg.mxu0
    %841 = vmatpush.bf16.xpose.msra.mxu0 0
    %842 = vmatpush.bf16.xpose.msra.mxu0 0
    %843 = vmatpush.bf16.xpose.msra.mxu0 0
    %844 = vmatpush.bf16.xpose.msra.mxu0 0
    %845 = vmatpush.bf16.xpose.msra.mxu0 0
    %846 = vmatpush.bf16.xpose.msra.mxu0 0
    %847 = vmatpush.bf16.xpose.msra.mxu0 0
    %848 = vmatpush.bf16.xpose.msra.mxu0 %v665
    %849 = vmatmul.bf16.gmra.mxu0 %v597
    %v850 = vpop.f32.mrf.mxu0
    %v851 = vadd.f32 %v832, %v850
    %v852 = vpop.f32.mrf.mxu0
    %v853 = vadd.f32 %v834, %v852
    %854 = vmatmul.bf16.gmra.mxu0 %v613
    %v855 = vpop.f32.mrf.mxu0
    %v856 = vadd.f32 %v837, %v855
    %v857 = vpop.f32.mrf.mxu0
    %v858 = vadd.f32 %v839, %v857
    %859 = vdwg.mxu0
    %860 = vmatpush.bf16.xpose.msra.mxu0 0
    %861 = vmatpush.bf16.xpose.msra.mxu0 0
    %862 = vmatpush.bf16.xpose.msra.mxu0 0
    %863 = vmatpush.bf16.xpose.msra.mxu0 0
    %864 = vmatpush.bf16.xpose.msra.mxu0 0
    %865 = vmatpush.bf16.xpose.msra.mxu0 0
    %866 = vmatpush.bf16.xpose.msra.mxu0 0
    %867 = vmatpush.bf16.xpose.msra.mxu0 %v666
    %868 = vmatmul.bf16.gmra.mxu0 %v598
    %v869 = vpop.f32.mrf.mxu0
    %v870 = vadd.f32 %v851, %v869
    %v871 = vpop.f32.mrf.mxu0
    %v872 = vadd.f32 %v853, %v871
    %873 = vmatmul.bf16.gmra.mxu0 %v614
    %v874 = vpop.f32.mrf.mxu0
    %v875 = vadd.f32 %v856, %v874
    %v876 = vpop.f32.mrf.mxu0
    %v877 = vadd.f32 %v858, %v876
    %878 = vdwg.mxu0
    %879 = vmatpush.bf16.xpose.msra.mxu0 0
    %880 = vmatpush.bf16.xpose.msra.mxu0 0
    %881 = vmatpush.bf16.xpose.msra.mxu0 0
    %882 = vmatpush.bf16.xpose.msra.mxu0 0
    %883 = vmatpush.bf16.xpose.msra.mxu0 0
    %884 = vmatpush.bf16.xpose.msra.mxu0 0
    %885 = vmatpush.bf16.xpose.msra.mxu0 0
    %886 = vmatpush.bf16.xpose.msra.mxu0 %v667
    %887 = vmatmul.bf16.gmra.mxu0 %v599
    %v888 = vpop.f32.mrf.mxu0
    %v889 = vadd.f32 %v870, %v888
    %v890 = vpop.f32.mrf.mxu0
    %v891 = vadd.f32 %v872, %v890
    %892 = vmatmul.bf16.gmra.mxu0 %v615
    %v893 = vpop.f32.mrf.mxu0
    %v894 = vadd.f32 %v875, %v893
    %v895 = vpop.f32.mrf.mxu0
    %v896 = vadd.f32 %v877, %v895
    %897 = vdwg.mxu0
    %898 = vmatpush.bf16.xpose.msra.mxu0 0
    %899 = vmatpush.bf16.xpose.msra.mxu0 0
    %900 = vmatpush.bf16.xpose.msra.mxu0 0
    %901 = vmatpush.bf16.xpose.msra.mxu0 0
    %902 = vmatpush.bf16.xpose.msra.mxu0 0
    %903 = vmatpush.bf16.xpose.msra.mxu0 0
    %904 = vmatpush.bf16.xpose.msra.mxu0 0
    %905 = vmatpush.bf16.xpose.msra.mxu0 %v668
    %906 = vmatmul.bf16.gmra.mxu0 %v600
    %v907 = vpop.f32.mrf.mxu0
    %v908 = vadd.f32 %v889, %v907
    %v909 = vpop.f32.mrf.mxu0
    %v910 = vadd.f32 %v891, %v909
    %911 = vmatmul.bf16.gmra.mxu0 %v616
    %v912 = vpop.f32.mrf.mxu0
    %v913 = vadd.f32 %v894, %v912
    %v914 = vpop.f32.mrf.mxu0
    %v915 = vadd.f32 %v896, %v914
    %916 = vdwg.mxu0
    %917 = vmatpush.bf16.xpose.msra.mxu0 0
    %918 = vmatpush.bf16.xpose.msra.mxu0 0
    %919 = vmatpush.bf16.xpose.msra.mxu0 0
    %920 = vmatpush.bf16.xpose.msra.mxu0 0
    %921 = vmatpush.bf16.xpose.msra.mxu0 0
    %922 = vmatpush.bf16.xpose.msra.mxu0 0
    %923 = vmatpush.bf16.xpose.msra.mxu0 0
    %924 = vmatpush.bf16.xpose.msra.mxu0 %v669
    %925 = vmatmul.bf16.gmra.mxu0 %v601
    %v926 = vpop.f32.mrf.mxu0
    %v927 = vadd.f32 %v908, %v926
    %v928 = vpop.f32.mrf.mxu0
    %v929 = vadd.f32 %v910, %v928
    %930 = vmatmul.bf16.gmra.mxu0 %v617
    %v931 = vpop.f32.mrf.mxu0
    %v932 = vadd.f32 %v913, %v931
    %v933 = vpop.f32.mrf.mxu0
    %v934 = vadd.f32 %v915, %v933
    %935 = vdwg.mxu0
    %936 = vmatpush.bf16.xpose.msra.mxu0 0
    %937 = vmatpush.bf16.xpose.msra.mxu0 0
    %938 = vmatpush.bf16.xpose.msra.mxu0 0
    %939 = vmatpush.bf16.xpose.msra.mxu0 0
    %940 = vmatpush.bf16.xpose.msra.mxu0 0
    %941 = vmatpush.bf16.xpose.msra.mxu0 0
    %942 = vmatpush.bf16.xpose.msra.mxu0 0
    %943 = vmatpush.bf16.xpose.msra.mxu0 %v670
    %944 = vmatmul.bf16.gmra.mxu0 %v602
    %v945 = vpop.f32.mrf.mxu0
    %v946 = vadd.f32 %v927, %v945
    %v947 = vpop.f32.mrf.mxu0
    %v948 = vadd.f32 %v929, %v947
    %949 = vmatmul.bf16.gmra.mxu0 %v618
    %v950 = vpop.f32.mrf.mxu0
    %v951 = vadd.f32 %v932, %v950
    %v952 = vpop.f32.mrf.mxu0
    %v953 = vadd.f32 %v934, %v952
    %954 = vdwg.mxu0
    %955 = vmatpush.bf16.xpose.msra.mxu0 0
    %956 = vmatpush.bf16.xpose.msra.mxu0 0
    %957 = vmatpush.bf16.xpose.msra.mxu0 0
    %958 = vmatpush.bf16.xpose.msra.mxu0 0
    %959 = vmatpush.bf16.xpose.msra.mxu0 0
    %960 = vmatpush.bf16.xpose.msra.mxu0 0
    %961 = vmatpush.bf16.xpose.msra.mxu0 0
    %962 = vmatpush.bf16.xpose.msra.mxu0 %v671
    %963 = vmatmul.bf16.gmra.mxu0 %v603
    %v964 = vpop.f32.mrf.mxu0
    %v965 = vadd.f32 %v946, %v964
    %v966 = vpop.f32.mrf.mxu0
    %v967 = vadd.f32 %v948, %v966
    %968 = vmatmul.bf16.gmra.mxu0 %v619
    %v969 = vpop.f32.mrf.mxu0
    %v970 = vadd.f32 %v951, %v969
    %v971 = vpop.f32.mrf.mxu0
    %v972 = vadd.f32 %v953, %v971
    %973 = vdwg.mxu0
    %974 = vmatpush.bf16.xpose.msra.mxu0 0
    %975 = vmatpush.bf16.xpose.msra.mxu0 0
    %976 = vmatpush.bf16.xpose.msra.mxu0 0
    %977 = vmatpush.bf16.xpose.msra.mxu0 0
    %978 = vmatpush.bf16.xpose.msra.mxu0 0
    %979 = vmatpush.bf16.xpose.msra.mxu0 0
    %980 = vmatpush.bf16.xpose.msra.mxu0 0
    %981 = vmatpush.bf16.xpose.msra.mxu0 %v672
    %982 = vmatmul.bf16.gmra.mxu0 %v604
    %v983 = vpop.f32.mrf.mxu0
    %v984 = vadd.f32 %v965, %v983
    %v985 = vpop.f32.mrf.mxu0
    %v986 = vadd.f32 %v967, %v985
    %987 = vmatmul.bf16.gmra.mxu0 %v620
    %v988 = vpop.f32.mrf.mxu0
    %v989 = vadd.f32 %v970, %v988
    %v990 = vpop.f32.mrf.mxu0
    %v991 = vadd.f32 %v972, %v990
    %992 = vdwg.mxu0
    %v993 = vadd.f32 %v621, %v984
    %v994 = vadd.f32 %v622, %v986
    %v995 = vadd.f32 %v623, %v989
    %v996 = vadd.f32 %v624, %v991
    %vm997 = vcmask 39936
    %998 = vst.msk [vmem:[%s3] sm:$0xff] %vm997, %v993
    %999 = vst.msk [vmem:[%s3 + $0x8] sm:$0xff] %vm997, %v994
    %1000 = vst.msk [vmem:[%s3 + $0x10] sm:$0xff] %vm997, %v995
    %1001 = vst.msk [vmem:[%s3 + $0x18] sm:$0xff] %vm997, %v996
    // Predicated region
    $region22: #{simple_mlp_forward_packed.1} parent=1 // pred_check
      _
    $region23: #{simple_mlp_forward_packed.1} parent=1 // pred_check_branch
      %1003 = sbr.rel (0) target = $region25
    $region24: #{simple_mlp_forward_packed.1} parent=1 // pred_region
      _
    $region25: #{simple_mlp_forward_packed.1} parent=1 // pred_fallthru
      _
    // Predicated region
    $region26: #{simple_mlp_forward_packed.1} parent=1 // pred_check
      _
    $region27: #{simple_mlp_forward_packed.1} parent=1 // pred_check_branch
      %1005 = sbr.rel (0) target = $region29
    $region28: #{simple_mlp_forward_packed.1} parent=1 // pred_region
      _
    $region29: #{simple_mlp_forward_packed.1} parent=1 // pred_fallthru
      _
    %1006 = vsyncpa [#allocation3], 1

</llo_original>
